<compile_context>
chip_gen: v7x
topology: tpu7x:2x2x1
jax: 0.10.0
libtpu: 0.0.40
codegen_flags: <defaults>
</compile_context>

<pallas_src>
import functools
import math

import jax
import jax.numpy as jnp
from jax.experimental import pallas as pl
from jax.experimental.pallas import tpu as pltpu


def _round_up(x: int, m: int) -> int:
    return ((x + m - 1) // m) * m


def _triangular_synapse_kernel(x_ref, wt_ref, o_ref, *, left, inv_radius, K, compute_dtype):
    """x_ref: (TN, L); wt_ref: (K, L); o_ref: (TN, L).  Pure VPU elementwise."""
    x = x_ref[...].astype(compute_dtype)
    w = wt_ref[...].astype(compute_dtype)          # load the whole (small) weight tile once
    xs = (x - left) * inv_radius                   # hoisted scale: d_k = xs - k
    # k == 0 : left shoulder ramp; start the accumulator here (no zeros init).
    acc = jnp.clip(1.0 - xs, 0.0, 1.0) * w[0]
    # 0 < k < K-1 : triangular memberships (K is small & static -> unrolled).
    for k in range(1, K - 1):
        acc = acc + jnp.maximum(1.0 - jnp.abs(xs - k), 0.0) * w[k]
    # k == K-1 : right shoulder ramp  (xs - (K-1) == (x - right)/r).
    acc = acc + jnp.clip(1.0 + (xs - (K - 1)), 0.0, 1.0) * w[K - 1]
    o_ref[...] = acc.astype(o_ref.dtype)


def triangular_synapse_forward(x, weights, *, left, right, count,
                               compute_dtype=jnp.float32,
                               target_block_bytes=2 * 1024 * 1024):
    """x: (..., *input_dim); weights: (*input_dim, K) with K = count + 2.

    compute_dtype=jnp.bfloat16 gives ~2x VPU throughput + half the HBM bytes on
    v6e/v7x; keep jnp.float32 on v5e (no bf16 VALU).
    """
    assert left < right and count >= 1
    K = count + 2
    radius = (right - left) / (count + 1)
    inv_radius = 1.0 / radius

    input_dim = tuple(weights.shape[:-1])
    assert weights.shape[-1] == K, "weights last dim must be count + 2"
    F = int(math.prod(input_dim))
    orig_shape = x.shape
    orig_dtype = x.dtype
    if F > 1:
        nd = len(input_dim)
        assert tuple(orig_shape[-nd:]) == input_dim, "x trailing dims must match input_dim"

    io_dtype = compute_dtype                                   # bf16 at the HBM boundary when bf16 compute
    wt = jnp.transpose(weights.reshape(F, K)).astype(io_dtype)  # (K, F)

    LANE = 128
    itemsize = jnp.dtype(io_dtype).itemsize

    if LANE % F == 0:
        # Fold `fold` feature groups into one 128-wide lane row (lane-dense).
        # Lane l of any row maps to feature l % F, so a tiled weight row is correct.
        fold = LANE // F
        L = LANE
        wl = jnp.tile(wt, (1, fold))                           # (K, 128)
        total = x.size
        rows = pl.cdiv(total, L)
        tn = min(max(8, (target_block_bytes // (L * itemsize)) // 8 * 8), _round_up(rows, 8))
        rows_p = _round_up(rows, tn)
        xf = x.reshape(-1).astype(io_dtype)
        if rows_p * L != total:
            xf = jnp.pad(xf, (0, rows_p * L - total))
        x2 = xf.reshape(rows_p, L)
    else:
        # Pad the flattened feature axis up to a multiple of 128; zero weights make
        # the padded lanes contribute nothing.
        L = _round_up(F, LANE)
        wl = jnp.pad(wt, ((0, 0), (0, L - F)))
        rows = x.size // F
        tn = min(max(8, (target_block_bytes // (L * itemsize)) // 8 * 8), _round_up(rows, 8))
        rows_p = _round_up(rows, tn)
        x2 = x.reshape(rows, F).astype(io_dtype)
        x2 = jnp.pad(x2, ((0, rows_p - rows), (0, L - F)))

    grid = rows_p // tn
    kernel = functools.partial(
        _triangular_synapse_kernel,
        left=float(left), inv_radius=float(inv_radius), K=K, compute_dtype=compute_dtype)

    out2 = pl.pallas_call(
        kernel,
        out_shape=jax.ShapeDtypeStruct((rows_p, L), io_dtype),
        grid_spec=pltpu.PrefetchScalarGridSpec(
            num_scalar_prefetch=0,
            grid=(grid,),
            in_specs=[
                pl.BlockSpec((tn, L), lambda i: (i, 0)),       # x tile (lane-dense)
                pl.BlockSpec((K, L), lambda i: (0, 0)),        # full (tiny) weight table
            ],
            out_specs=pl.BlockSpec((tn, L), lambda i: (i, 0)),
        ),
        compiler_params=pltpu.CompilerParams(
            dimension_semantics=("parallel",),                 # row axis shards across TCs (v7x)
        ),
    )(x2, wl)

    if LANE % F == 0:
        out = out2.reshape(-1)[: x.size].reshape(orig_shape)
    else:
        out = out2[:rows, :F].reshape(orig_shape)
    return out.astype(orig_dtype)


def _reference_forward(x, weights, *, left, right, count):
    """Pure-JAX reference mirroring the PyTorch forward (stack -> mul -> sum)."""
    K = count + 2
    radius = (right - left) / (count + 1)
    mfs = []
    for k in range(K):
        center = left + radius * k
        d = (x - center) / radius
        if k == 0:
            m = jnp.clip(1.0 - d, 0.0, 1.0)
        elif k == K - 1:
            m = jnp.clip(1.0 + d, 0.0, 1.0)
        else:
            m = jnp.maximum(1.0 - jnp.abs(d), 0.0)
        mfs.append(m)
    stacked = jnp.stack(mfs, axis=-1)              # x.shape + (K,)
    return jnp.sum(stacked * weights, axis=-1)     # broadcast weights over leading batch dims


def ramp_init(count, input_dim=(1,)):
    """TriangularSynapse.ramp_init: linspace(-1, 1, count+2) broadcast over input_dim."""
    K = count + 2
    sample = jnp.linspace(-1.0, 1.0, K, dtype=jnp.float32)
    return jnp.broadcast_to(sample, tuple(input_dim) + (K,))


if __name__ == "__main__":
    left, right, count = -1.0, 1.0, 5          # K = 7 membership functions
    key = jax.random.PRNGKey(0)
    k1, k2, k3, k4 = jax.random.split(key, 4)

    # Case A: 1-D feature dim (D=32) -> folded 4-per-lane-row into 128 lanes.
    B, S, D = 2, 64, 32
    x_a = jax.random.uniform(k1, (B, S, D), jnp.float32, minval=-1.5, maxval=1.5)
    w_a = jax.random.uniform(k2, (D, count + 2), jnp.float32, minval=-1.0, maxval=1.0)
    out_a = jax.block_until_ready(
        triangular_synapse_forward(x_a, w_a, left=left, right=right, count=count))
    ref_a = _reference_forward(x_a, w_a, left=left, right=right, count=count)
    assert out_a.shape == x_a.shape
    assert jnp.allclose(out_a, ref_a, atol=1e-4, rtol=1e-5), "f32 mismatch (case A)"

    # Case B: multi-dim input_dim (C,H,W) -> flattened feature axis of 1024 lanes.
    Bb, C, H, W = 2, 4, 16, 16
    x_b = jax.random.uniform(k3, (Bb, C, H, W), jnp.float32, minval=-1.5, maxval=1.5)
    w_b = jax.random.uniform(k4, (C, H, W, count + 2), jnp.float32, minval=-1.0, maxval=1.0)
    out_b = jax.block_until_ready(
        triangular_synapse_forward(x_b, w_b, left=left, right=right, count=count))
    ref_b = _reference_forward(x_b, w_b, left=left, right=right, count=count)
    assert out_b.shape == x_b.shape
    assert jnp.allclose(out_b, ref_b, atol=1e-4, rtol=1e-5), "f32 mismatch (case B)"

    # bf16 compute + bf16 HBM I/O path (the recommended setting on v6e/v7x).
    out_bf = jax.block_until_ready(
        triangular_synapse_forward(x_a, w_a, left=left, right=right, count=count,
                                   compute_dtype=jnp.bfloat16))
    assert jnp.allclose(out_bf.astype(jnp.float32), ref_a, atol=0.15, rtol=0.0), "bf16 mismatch"

    print("KERNEL_OK")
</pallas_src>

<mosaic_0001>
module attributes {stable_mosaic.version = 11 : i64} {
  func.func @_triangular_synapse_kernel(%arg0: i32, %arg1: memref<32x128xf32, #tpu.memory_space<vmem>>, %arg2: memref<7x128xf32, #tpu.memory_space<vmem>>, %arg3: memref<32x128xf32, #tpu.memory_space<vmem>>) attributes {dimension_semantics = [#tpu.dimension_semantics<parallel>], iteration_bounds = array<i64: 1>, scalar_prefetch = 0 : i64, scratch_operands = 0 : i64, tpu.core_type = #tpu.core_type<tc>, window_params = [{transform_indices = @transform_0, window_bounds = array<i64: 32, 128>}, {pipeline_mode = #tpu.pipeline_mode<synchronous>, transform_indices = @transform_1, window_bounds = array<i64: 7, 128>}, {transform_indices = @transform_2, window_bounds = array<i64: 32, 128>}]} {
    %c0 = arith.constant 0 : index
    %c0_0 = arith.constant 0 : index
    %0 = vector.load %arg1[%c0, %c0_0] : memref<32x128xf32, #tpu.memory_space<vmem>>, vector<32x128xf32>
    %c0_1 = arith.constant 0 : index
    %c0_2 = arith.constant 0 : index
    %1 = vector.load %arg2[%c0_1, %c0_2] : memref<7x128xf32, #tpu.memory_space<vmem>>, vector<7x128xf32>
    %cst = arith.constant -1.000000e+00 : f32
    %2 = vector.broadcast %cst : f32 to vector<32x128xf32>
    %3 = arith.subf %0, %2 : vector<32x128xf32>
    %cst_3 = arith.constant 3.000000e+00 : f32
    %4 = vector.broadcast %cst_3 : f32 to vector<32x128xf32>
    %5 = arith.mulf %3, %4 : vector<32x128xf32>
    %cst_4 = arith.constant 1.000000e+00 : f32
    %6 = vector.broadcast %cst_4 : f32 to vector<32x128xf32>
    %7 = arith.subf %6, %5 : vector<32x128xf32>
    %cst_5 = arith.constant 0.000000e+00 : f32
    %cst_6 = arith.constant 1.000000e+00 : f32
    %8 = vector.broadcast %cst_5 : f32 to vector<32x128xf32>
    %9 = arith.maximumf %8, %7 : vector<32x128xf32>
    %10 = vector.broadcast %cst_6 : f32 to vector<32x128xf32>
    %11 = arith.minimumf %10, %9 : vector<32x128xf32>
    %12 = vector.extract_strided_slice %1 {offsets = [0, 0], sizes = [1, 128], strides = [1, 1]} : vector<7x128xf32> to vector<1x128xf32>
    %13 = vector.shape_cast %12 : vector<1x128xf32> to vector<128xf32>
    %14 = vector.shape_cast %13 : vector<128xf32> to vector<1x128xf32>
    %15 = vector.broadcast %14 : vector<1x128xf32> to vector<32x128xf32>
    %16 = arith.mulf %11, %15 : vector<32x128xf32>
    %cst_7 = arith.constant 1.000000e+00 : f32
    %17 = vector.broadcast %cst_7 : f32 to vector<32x128xf32>
    %18 = arith.subf %5, %17 : vector<32x128xf32>
    %19 = math.absf %18 : vector<32x128xf32>
    %cst_8 = arith.constant 1.000000e+00 : f32
    %20 = vector.broadcast %cst_8 : f32 to vector<32x128xf32>
    %21 = arith.subf %20, %19 : vector<32x128xf32>
    %cst_9 = arith.constant 0.000000e+00 : f32
    %22 = vector.broadcast %cst_9 : f32 to vector<32x128xf32>
    %23 = arith.maximumf %21, %22 : vector<32x128xf32>
    %24 = vector.extract_strided_slice %1 {offsets = [1, 0], sizes = [1, 128], strides = [1, 1]} : vector<7x128xf32> to vector<1x128xf32>
    %25 = vector.shape_cast %24 : vector<1x128xf32> to vector<128xf32>
    %26 = vector.shape_cast %25 : vector<128xf32> to vector<1x128xf32>
    %27 = vector.broadcast %26 : vector<1x128xf32> to vector<32x128xf32>
    %28 = arith.mulf %23, %27 : vector<32x128xf32>
    %29 = arith.addf %16, %28 : vector<32x128xf32>
    %cst_10 = arith.constant 2.000000e+00 : f32
    %30 = vector.broadcast %cst_10 : f32 to vector<32x128xf32>
    %31 = arith.subf %5, %30 : vector<32x128xf32>
    %32 = math.absf %31 : vector<32x128xf32>
    %cst_11 = arith.constant 1.000000e+00 : f32
    %33 = vector.broadcast %cst_11 : f32 to vector<32x128xf32>
    %34 = arith.subf %33, %32 : vector<32x128xf32>
    %cst_12 = arith.constant 0.000000e+00 : f32
    %35 = vector.broadcast %cst_12 : f32 to vector<32x128xf32>
    %36 = arith.maximumf %34, %35 : vector<32x128xf32>
    %37 = vector.extract_strided_slice %1 {offsets = [2, 0], sizes = [1, 128], strides = [1, 1]} : vector<7x128xf32> to vector<1x128xf32>
    %38 = vector.shape_cast %37 : vector<1x128xf32> to vector<128xf32>
    %39 = vector.shape_cast %38 : vector<128xf32> to vector<1x128xf32>
    %40 = vector.broadcast %39 : vector<1x128xf32> to vector<32x128xf32>
    %41 = arith.mulf %36, %40 : vector<32x128xf32>
    %42 = arith.addf %29, %41 : vector<32x128xf32>
    %cst_13 = arith.constant 3.000000e+00 : f32
    %43 = vector.broadcast %cst_13 : f32 to vector<32x128xf32>
    %44 = arith.subf %5, %43 : vector<32x128xf32>
    %45 = math.absf %44 : vector<32x128xf32>
    %cst_14 = arith.constant 1.000000e+00 : f32
    %46 = vector.broadcast %cst_14 : f32 to vector<32x128xf32>
    %47 = arith.subf %46, %45 : vector<32x128xf32>
    %cst_15 = arith.constant 0.000000e+00 : f32
    %48 = vector.broadcast %cst_15 : f32 to vector<32x128xf32>
    %49 = arith.maximumf %47, %48 : vector<32x128xf32>
    %50 = vector.extract_strided_slice %1 {offsets = [3, 0], sizes = [1, 128], strides = [1, 1]} : vector<7x128xf32> to vector<1x128xf32>
    %51 = vector.shape_cast %50 : vector<1x128xf32> to vector<128xf32>
    %52 = vector.shape_cast %51 : vector<128xf32> to vector<1x128xf32>
    %53 = vector.broadcast %52 : vector<1x128xf32> to vector<32x128xf32>
    %54 = arith.mulf %49, %53 : vector<32x128xf32>
    %55 = arith.addf %42, %54 : vector<32x128xf32>
    %cst_16 = arith.constant 4.000000e+00 : f32
    %56 = vector.broadcast %cst_16 : f32 to vector<32x128xf32>
    %57 = arith.subf %5, %56 : vector<32x128xf32>
    %58 = math.absf %57 : vector<32x128xf32>
    %cst_17 = arith.constant 1.000000e+00 : f32
    %59 = vector.broadcast %cst_17 : f32 to vector<32x128xf32>
    %60 = arith.subf %59, %58 : vector<32x128xf32>
    %cst_18 = arith.constant 0.000000e+00 : f32
    %61 = vector.broadcast %cst_18 : f32 to vector<32x128xf32>
    %62 = arith.maximumf %60, %61 : vector<32x128xf32>
    %63 = vector.extract_strided_slice %1 {offsets = [4, 0], sizes = [1, 128], strides = [1, 1]} : vector<7x128xf32> to vector<1x128xf32>
    %64 = vector.shape_cast %63 : vector<1x128xf32> to vector<128xf32>
    %65 = vector.shape_cast %64 : vector<128xf32> to vector<1x128xf32>
    %66 = vector.broadcast %65 : vector<1x128xf32> to vector<32x128xf32>
    %67 = arith.mulf %62, %66 : vector<32x128xf32>
    %68 = arith.addf %55, %67 : vector<32x128xf32>
    %cst_19 = arith.constant 5.000000e+00 : f32
    %69 = vector.broadcast %cst_19 : f32 to vector<32x128xf32>
    %70 = arith.subf %5, %69 : vector<32x128xf32>
    %71 = math.absf %70 : vector<32x128xf32>
    %cst_20 = arith.constant 1.000000e+00 : f32
    %72 = vector.broadcast %cst_20 : f32 to vector<32x128xf32>
    %73 = arith.subf %72, %71 : vector<32x128xf32>
    %cst_21 = arith.constant 0.000000e+00 : f32
    %74 = vector.broadcast %cst_21 : f32 to vector<32x128xf32>
    %75 = arith.maximumf %73, %74 : vector<32x128xf32>
    %76 = vector.extract_strided_slice %1 {offsets = [5, 0], sizes = [1, 128], strides = [1, 1]} : vector<7x128xf32> to vector<1x128xf32>
    %77 = vector.shape_cast %76 : vector<1x128xf32> to vector<128xf32>
    %78 = vector.shape_cast %77 : vector<128xf32> to vector<1x128xf32>
    %79 = vector.broadcast %78 : vector<1x128xf32> to vector<32x128xf32>
    %80 = arith.mulf %75, %79 : vector<32x128xf32>
    %81 = arith.addf %68, %80 : vector<32x128xf32>
    %cst_22 = arith.constant 6.000000e+00 : f32
    %82 = vector.broadcast %cst_22 : f32 to vector<32x128xf32>
    %83 = arith.subf %5, %82 : vector<32x128xf32>
    %cst_23 = arith.constant 1.000000e+00 : f32
    %84 = vector.broadcast %cst_23 : f32 to vector<32x128xf32>
    %85 = arith.addf %84, %83 : vector<32x128xf32>
    %cst_24 = arith.constant 0.000000e+00 : f32
    %cst_25 = arith.constant 1.000000e+00 : f32
    %86 = vector.broadcast %cst_24 : f32 to vector<32x128xf32>
    %87 = arith.maximumf %86, %85 : vector<32x128xf32>
    %88 = vector.broadcast %cst_25 : f32 to vector<32x128xf32>
    %89 = arith.minimumf %88, %87 : vector<32x128xf32>
    %90 = vector.extract_strided_slice %1 {offsets = [6, 0], sizes = [1, 128], strides = [1, 1]} : vector<7x128xf32> to vector<1x128xf32>
    %91 = vector.shape_cast %90 : vector<1x128xf32> to vector<128xf32>
    %92 = vector.shape_cast %91 : vector<128xf32> to vector<1x128xf32>
    %93 = vector.broadcast %92 : vector<1x128xf32> to vector<32x128xf32>
    %94 = arith.mulf %89, %93 : vector<32x128xf32>
    %95 = arith.addf %81, %94 : vector<32x128xf32>
    %c0_26 = arith.constant 0 : index
    %c0_27 = arith.constant 0 : index
    %96 = vector.load %arg3[%c0_26, %c0_27] : memref<32x128xf32, #tpu.memory_space<vmem>>, vector<32x128xf32>
    tpu.vector_store %arg3[%c0_26, %c0_27], %95 {strides = array<i32>} : memref<32x128xf32, #tpu.memory_space<vmem>>, vector<32x128xf32>,
    return
  }
  func.func @transform_0(%arg0: i32) -> (i32, i32) {
    %c0_i32 = arith.constant 0 : i32
    %c0_i32_0 = arith.constant 0 : i32
    return %arg0, %c0_i32 : i32, i32
  }
  func.func @transform_1(%arg0: i32) -> (i32, i32) {
    %c0_i32 = arith.constant 0 : i32
    %c0_i32_0 = arith.constant 0 : i32
    %c0_i32_1 = arith.constant 0 : i32
    return %c0_i32, %c0_i32_0 : i32, i32
  }
  func.func @transform_2(%arg0: i32) -> (i32, i32) {
    %c0_i32 = arith.constant 0 : i32
    %c0_i32_0 = arith.constant 0 : i32
    return %arg0, %c0_i32 : i32, i32
  }
}

</mosaic_0001>

<llo_original>
// kernel: tpu_custom_call.1
$region0: #{tpu_custom_call.1}
  #allocation0 [shape = 'u32[]', space=smem, size = 0x4, offset = 0x4, fixed_abs, tag = 'smem constant byte address 0x4 - core index']
  #allocation1 [shape = 'u32[144,128]{1,0:T(1,128)}', space=vmem, size = 0x12000, scoped, tag = 'internal scratch']
  %s0 = inlined_call_operand.hbm [shape: f32[32,128], index: 0, kind: input, shape index: {}]
  %s1 = inlined_call_operand.hbm [shape: f32[7,128], index: 1, kind: input, shape index: {}]
  %s2 = inlined_call_operand.hbm [shape: f32[32,128], index: 2, kind: output, shape index: {}]
  %s3 = sld [smem:[#allocation0]]
  $region26: #{tpu_custom_call.1} parent=0
    _
  %s5 = ssub.s32 1, %s3
  %s6 = scalar_select 0, %s5, %s3
  $region1: #{tpu_custom_call.1} parent=0
    #allocation2 [shape = 'u8[16384]{0}', space=vmem, size = 0x4000, scoped, tag = 'input window, operand 0, single buffered']
    #allocation3 [shape = 's32[1]{0}', space=sflag, size = 0x4, scoped, tag = 'scoped memory for tpu_custom_call.1']
    #allocation4 [shape = 's32[1]{0}', space=sflag, size = 0x4, scoped, tag = 'scoped memory for tpu_custom_call.1']
    #allocation5 [shape = 'u8[4096]{0}', space=vmem, size = 0x1000, scoped, tag = 'input window, operand 1, single buffered']
    #allocation6 [shape = 's32[1]{0}', space=sflag, size = 0x4, scoped, tag = 'scoped memory for tpu_custom_call.1']
    #allocation7 [shape = 'u8[16384]{0}', space=vmem, size = 0x4000, scoped, tag = 'output window, operand 0, single buffered']
    %7 = vsyncpa [#allocation3], 0
    %8 = vsyncpa [#allocation6], 0
    %9 = vsyncpa [#allocation4], 0
    // Predicated region
    $region2: #{tpu_custom_call.1} parent=1 // pred_check
      _
    $region3: #{tpu_custom_call.1} parent=1 // pred_check_branch
      %11 = sbr.rel (0) target = $region5
    $region4: #{tpu_custom_call.1} parent=1 // pred_region
      %s13 = ssub.s32 512, 512
      %14 = vsyncadd [#allocation3], %s13
      %s15 = sshll.u32 [#allocation2], 4
      %s16 = int_to_ptr.vmem [resolvable:$true] %s15
      %21 = dma.hbm_to_vmem [thread:$0]  %s0, 512, %s16, [#allocation3], 128, 128, 8
    $region5: #{tpu_custom_call.1} parent=1 // pred_fallthru
      _
    // Predicated region
    $region6: #{tpu_custom_call.1} parent=1 // pred_check
      _
    $region7: #{tpu_custom_call.1} parent=1 // pred_check_branch
      %23 = sbr.rel (0) target = $region9
    $region8: #{tpu_custom_call.1} parent=1 // pred_region
      %s25 = ssub.s32 128, 128
      %26 = vsyncadd [#allocation6], %s25
      %s28 = sshll.u32 [#allocation5], 4
      %s29 = int_to_ptr.vmem [resolvable:$true] %s28
      %31 = dma.hbm_to_vmem [thread:$0]  %s1, 128, %s29, [#allocation6]
    $region9: #{tpu_custom_call.1} parent=1 // pred_fallthru
      _
    // Predicated region
    $region10: #{tpu_custom_call.1} parent=1 // pred_check
      _
    $region11: #{tpu_custom_call.1} parent=1 // pred_check_branch
      %33 = sbr.rel (0) target = $region13
    $region12: #{tpu_custom_call.1} parent=1 // pred_region
      %34 = dma.done [#allocation3], 512
    $region13: #{tpu_custom_call.1} parent=1 // pred_fallthru
      _
    // Predicated region
    $region14: #{tpu_custom_call.1} parent=1 // pred_check
      _
    $region15: #{tpu_custom_call.1} parent=1 // pred_check_branch
      %36 = sbr.rel (0) target = $region17
    $region16: #{tpu_custom_call.1} parent=1 // pred_region
      %37 = dma.done [#allocation6], 128
    $region17: #{tpu_custom_call.1} parent=1 // pred_fallthru
      _
    %v38 = vld [vmem:[#allocation2] sm:$0xff]
    %v39 = vld [vmem:[#allocation2 + $0x8] sm:$0xff]
    %v40 = vld [vmem:[#allocation2 + $0x10] sm:$0xff]
    %v41 = vld [vmem:[#allocation2 + $0x18] sm:$0xff]
    %v42 = vld [vmem:[#allocation5] sm:$0x7f]
    %v43 = vsub.f32 %v38, -1.0
    %v44 = vsub.f32 %v39, -1.0
    %v45 = vsub.f32 %v40, -1.0
    %v46 = vsub.f32 %v41, -1.0
    %v47 = vmul.f32 %v43, 3.0
    %v48 = vmul.f32 %v44, 3.0
    %v49 = vmul.f32 %v45, 3.0
    %v50 = vmul.f32 %v46, 3.0
    %v51 = vsub.f32 1.0, %v47
    %v52 = vsub.f32 1.0, %v48
    %v53 = vsub.f32 1.0, %v49
    %v54 = vsub.f32 1.0, %v50
    %v55 = vmax.f32 %v51, 0.0
    %v56 = vmax.f32 %v52, 0.0
    %v57 = vmax.f32 %v53, 0.0
    %v58 = vmax.f32 %v54, 0.0
    %v59 = vmin.f32 %v55, 1.0
    %v60 = vmin.f32 %v56, 1.0
    %v61 = vmin.f32 %v57, 1.0
    %v62 = vmin.f32 %v58, 1.0
    %v63 = vlaneseq
    %v64 = vshrl.u32 %v63, 7
    %v65 = vsub.s32 0, %v64
    %v66 = vrot.slane %v42, %v65
    %v67 = vmul.f32 %v59, %v66
    %v68 = vmul.f32 %v60, %v66
    %v69 = vmul.f32 %v61, %v66
    %v70 = vmul.f32 %v62, %v66
    %v71 = vsub.f32 %v47, 1.0
    %v72 = vsub.f32 %v48, 1.0
    %v73 = vsub.f32 %v49, 1.0
    %v74 = vsub.f32 %v50, 1.0
    %v75 = vand.u32 2147483647, %v71
    %v76 = vand.u32 2147483647, %v72
    %v77 = vand.u32 2147483647, %v73
    %v78 = vand.u32 2147483647, %v74
    %v79 = vsub.f32 1.0, %v75
    %v80 = vsub.f32 1.0, %v76
    %v81 = vsub.f32 1.0, %v77
    %v82 = vsub.f32 1.0, %v78
    %v83 = vmax.f32 %v79, 0.0
    %v84 = vmax.f32 %v80, 0.0
    %v85 = vmax.f32 %v81, 0.0
    %v86 = vmax.f32 %v82, 0.0
    %v87 = vlaneseq
    %v88 = vshrl.u32 %v87, 7
    %v89 = vsub.s32 1, %v88
    %v90 = vrot.slane %v42, %v89
    %v91 = vmul.f32 %v83, %v90
    %v92 = vmul.f32 %v84, %v90
    %v93 = vmul.f32 %v85, %v90
    %v94 = vmul.f32 %v86, %v90
    %v95 = vadd.f32 %v67, %v91
    %v96 = vadd.f32 %v68, %v92
    %v97 = vadd.f32 %v69, %v93
    %v98 = vadd.f32 %v70, %v94
    %v99 = vsub.f32 %v47, 2.0
    %v100 = vsub.f32 %v48, 2.0
    %v101 = vsub.f32 %v49, 2.0
    %v102 = vsub.f32 %v50, 2.0
    %v103 = vand.u32 2147483647, %v99
    %v104 = vand.u32 2147483647, %v100
    %v105 = vand.u32 2147483647, %v101
    %v106 = vand.u32 2147483647, %v102
    %v107 = vsub.f32 1.0, %v103
    %v108 = vsub.f32 1.0, %v104
    %v109 = vsub.f32 1.0, %v105
    %v110 = vsub.f32 1.0, %v106
    %v111 = vmax.f32 %v107, 0.0
    %v112 = vmax.f32 %v108, 0.0
    %v113 = vmax.f32 %v109, 0.0
    %v114 = vmax.f32 %v110, 0.0
    %v115 = vlaneseq
    %v116 = vshrl.u32 %v115, 7
    %v117 = vsub.s32 2, %v116
    %v118 = vrot.slane %v42, %v117
    %v119 = vmul.f32 %v111, %v118
    %v120 = vmul.f32 %v112, %v118
    %v121 = vmul.f32 %v113, %v118
    %v122 = vmul.f32 %v114, %v118
    %v123 = vadd.f32 %v95, %v119
    %v124 = vadd.f32 %v96, %v120
    %v125 = vadd.f32 %v97, %v121
    %v126 = vadd.f32 %v98, %v122
    %v127 = vsub.f32 %v47, 3.0
    %v128 = vsub.f32 %v48, 3.0
    %v129 = vsub.f32 %v49, 3.0
    %v130 = vsub.f32 %v50, 3.0
    %v131 = vand.u32 2147483647, %v127
    %v132 = vand.u32 2147483647, %v128
    %v133 = vand.u32 2147483647, %v129
    %v134 = vand.u32 2147483647, %v130
    %v135 = vsub.f32 1.0, %v131
    %v136 = vsub.f32 1.0, %v132
    %v137 = vsub.f32 1.0, %v133
    %v138 = vsub.f32 1.0, %v134
    %v139 = vmax.f32 %v135, 0.0
    %v140 = vmax.f32 %v136, 0.0
    %v141 = vmax.f32 %v137, 0.0
    %v142 = vmax.f32 %v138, 0.0
    %v143 = vlaneseq
    %v144 = vshrl.u32 %v143, 7
    %v145 = vsub.s32 3, %v144
    %v146 = vrot.slane %v42, %v145
    %v147 = vmul.f32 %v139, %v146
    %v148 = vmul.f32 %v140, %v146
    %v149 = vmul.f32 %v141, %v146
    %v150 = vmul.f32 %v142, %v146
    %v151 = vadd.f32 %v123, %v147
    %v152 = vadd.f32 %v124, %v148
    %v153 = vadd.f32 %v125, %v149
    %v154 = vadd.f32 %v126, %v150
    %v155 = vsub.f32 %v47, 4.0
    %v156 = vsub.f32 %v48, 4.0
    %v157 = vsub.f32 %v49, 4.0
    %v158 = vsub.f32 %v50, 4.0
    %v159 = vand.u32 2147483647, %v155
    %v160 = vand.u32 2147483647, %v156
    %v161 = vand.u32 2147483647, %v157
    %v162 = vand.u32 2147483647, %v158
    %v163 = vsub.f32 1.0, %v159
    %v164 = vsub.f32 1.0, %v160
    %v165 = vsub.f32 1.0, %v161
    %v166 = vsub.f32 1.0, %v162
    %v167 = vmax.f32 %v163, 0.0
    %v168 = vmax.f32 %v164, 0.0
    %v169 = vmax.f32 %v165, 0.0
    %v170 = vmax.f32 %v166, 0.0
    %v171 = vlaneseq
    %v172 = vshrl.u32 %v171, 7
    %v173 = vsub.s32 4, %v172
    %v174 = vrot.slane %v42, %v173
    %v175 = vmul.f32 %v167, %v174
    %v176 = vmul.f32 %v168, %v174
    %v177 = vmul.f32 %v169, %v174
    %v178 = vmul.f32 %v170, %v174
    %v179 = vadd.f32 %v151, %v175
    %v180 = vadd.f32 %v152, %v176
    %v181 = vadd.f32 %v153, %v177
    %v182 = vadd.f32 %v154, %v178
    %v183 = vsub.f32 %v47, 5.0
    %v184 = vsub.f32 %v48, 5.0
    %v185 = vsub.f32 %v49, 5.0
    %v186 = vsub.f32 %v50, 5.0
    %v187 = vand.u32 2147483647, %v183
    %v188 = vand.u32 2147483647, %v184
    %v189 = vand.u32 2147483647, %v185
    %v190 = vand.u32 2147483647, %v186
    %v191 = vsub.f32 1.0, %v187
    %v192 = vsub.f32 1.0, %v188
    %v193 = vsub.f32 1.0, %v189
    %v194 = vsub.f32 1.0, %v190
    %v195 = vmax.f32 %v191, 0.0
    %v196 = vmax.f32 %v192, 0.0
    %v197 = vmax.f32 %v193, 0.0
    %v198 = vmax.f32 %v194, 0.0
    %v199 = vlaneseq
    %v200 = vshrl.u32 %v199, 7
    %v201 = vsub.s32 5, %v200
    %v202 = vrot.slane %v42, %v201
    %v203 = vmul.f32 %v195, %v202
    %v204 = vmul.f32 %v196, %v202
    %v205 = vmul.f32 %v197, %v202
    %v206 = vmul.f32 %v198, %v202
    %v207 = vadd.f32 %v179, %v203
    %v208 = vadd.f32 %v180, %v204
    %v209 = vadd.f32 %v181, %v205
    %v210 = vadd.f32 %v182, %v206
    %v211 = vsub.f32 %v47, 6.0
    %v212 = vsub.f32 %v48, 6.0
    %v213 = vsub.f32 %v49, 6.0
    %v214 = vsub.f32 %v50, 6.0
    %v215 = vadd.f32 %v211, 1.0
    %v216 = vadd.f32 %v212, 1.0
    %v217 = vadd.f32 %v213, 1.0
    %v218 = vadd.f32 %v214, 1.0
    %v219 = vmax.f32 %v215, 0.0
    %v220 = vmax.f32 %v216, 0.0
    %v221 = vmax.f32 %v217, 0.0
    %v222 = vmax.f32 %v218, 0.0
    %v223 = vmin.f32 %v219, 1.0
    %v224 = vmin.f32 %v220, 1.0
    %v225 = vmin.f32 %v221, 1.0
    %v226 = vmin.f32 %v222, 1.0
    %v227 = vlaneseq
    %v228 = vshrl.u32 %v227, 7
    %v229 = vsub.s32 6, %v228
    %v230 = vrot.slane %v42, %v229
    %v231 = vmul.f32 %v223, %v230
    %v232 = vmul.f32 %v224, %v230
    %v233 = vmul.f32 %v225, %v230
    %v234 = vmul.f32 %v226, %v230
    %v235 = vadd.f32 %v207, %v231
    %v236 = vadd.f32 %v208, %v232
    %v237 = vadd.f32 %v209, %v233
    %v238 = vadd.f32 %v210, %v234
    %239 = vst [vmem:[#allocation7] sm:$0xff] %v235
    %240 = vst [vmem:[#allocation7 + $0x8] sm:$0xff] %v236
    %241 = vst [vmem:[#allocation7 + $0x10] sm:$0xff] %v237
    %242 = vst [vmem:[#allocation7 + $0x18] sm:$0xff] %v238
    // Predicated region
    $region18: #{tpu_custom_call.1} parent=1 // pred_check
      _
    $region19: #{tpu_custom_call.1} parent=1 // pred_check_branch
      %244 = sbr.rel (0) target = $region21
    $region20: #{tpu_custom_call.1} parent=1 // pred_region
      %s246 = ssub.s32 512, 512
      %247 = vsyncadd [#allocation4], %s246
      %s248 = sshll.u32 [#allocation7], 4
      %s249 = int_to_ptr.vmem [resolvable:$true] %s248
      %254 = dma.vmem_to_hbm [thread:$0]  %s249, 512, %s2, [#allocation4], 128, 128, 8
    $region21: #{tpu_custom_call.1} parent=1 // pred_fallthru
      _
    // Predicated region
    $region22: #{tpu_custom_call.1} parent=1 // pred_check
      _
    $region23: #{tpu_custom_call.1} parent=1 // pred_check_branch
      %256 = sbr.rel (0) target = $region25
    $region24: #{tpu_custom_call.1} parent=1 // pred_region
      %257 = dma.done [#allocation4], 512
    $region25: #{tpu_custom_call.1} parent=1 // pred_fallthru
      _
    %258 = vsyncpa [#allocation3], 1
    %259 = vsyncpa [#allocation6], 1
    %260 = vsyncpa [#allocation4], 1

</llo_original>
